<compile_context>
chip_gen: v5e
topology: v5e:2x2
jax: 0.10.0
libtpu: 0.0.40
codegen_flags: <defaults>
</compile_context>

<pallas_src>
import jax
import jax.numpy as jnp
from jax.experimental import pallas as pl
from jax.experimental.pallas import tpu as pltpu

EPS = 1e-5
LANE = 128
SUB = 16  # bf16 sublane packing: keep batch tiles unmasked on all generations


def _round_up(x, m):
    return (x + m - 1) // m * m


def _vmem_capacity_bytes():
    """Physical per-core VMEM; conservative 64 MiB (v7x) fallback."""
    try:
        cap = int(pltpu.get_tpu_info().vmem_capacity_bytes)
        if cap > 0:
            return cap
    except Exception:
        pass
    return 64 * 2**20


def _fk_divisors(Fp):
    """Lane-multiple slab sizes that divide Fp exactly, descending."""
    n = Fp // LANE
    return [d * LANE for d in range(n, 0, -1) if n % d == 0]


def _mlp_kernel(x_ref, w1_ref, b1_ref, w2_ref, b2_ref, w3_ref, b3_ref,
                o_ref, acc_ref):
    """Fused 3-layer MLP (BN pre-folded); layer-1 K-streamed over grid axis 1."""
    k = pl.program_id(1)

    @pl.when(k == 0)
    def _init():
        acc_ref[...] = jnp.zeros_like(acc_ref)

    # Layer 1 partial product for this in_feature slab (cast fused in-kernel,
    # f32 accumulation in VMEM scratch).
    acc_ref[...] += jnp.dot(x_ref[...].astype(w1_ref.dtype), w1_ref[...],
                            preferred_element_type=jnp.float32)

    @pl.when(k == pl.num_programs(1) - 1)
    def _finish():
        # Bias + ReLU in f32 (accumulator dtype); Dropout = identity in eval.
        h = jnp.maximum(acc_ref[...] + b1_ref[...], 0.0)
        # Layer 2: Linear(+folded BN) -> ReLU
        h = jnp.dot(h.astype(w2_ref.dtype), w2_ref[...],
                    preferred_element_type=jnp.float32)
        h = jnp.maximum(h + b2_ref[...], 0.0)
        # Layer 3: logits
        y = jnp.dot(h.astype(w3_ref.dtype), w3_ref[...],
                    preferred_element_type=jnp.float32)
        o_ref[...] = (y + b3_ref[...]).astype(o_ref.dtype)


def prepare_params(params, *, compute_dtype=jnp.bfloat16):
    """One-time transform: fold eval-mode BN into the Linears, pad feature
    dims to multiples of 128 lanes, cast weights to bf16 (biases stay f32)."""
    w1, b1 = params["w1"], params["b1"]
    w2, b2 = params["w2"], params["b2"]
    w3, b3 = params["w3"], params["b3"]

    # ((x@W + b) - m) * g * rsqrt(v+eps) + beta == x @ (W*s) + ((b-m)*s + beta)
    s1 = params["g1"] * jax.lax.rsqrt(params["v1"] + EPS)
    w1f = w1 * s1
    b1f = (b1 - params["m1"]) * s1 + params["be1"]
    s2 = params["g2"] * jax.lax.rsqrt(params["v2"] + EPS)
    w2f = w2 * s2
    b2f = (b2 - params["m2"]) * s2 + params["be2"]

    F, H = w1.shape
    O = w3.shape[1]
    Fp, Hp, Op = _round_up(F, LANE), _round_up(H, LANE), _round_up(O, LANE)

    def pad2(a, r, c):
        return jnp.pad(a, ((0, r - a.shape[0]), (0, c - a.shape[1])))

    return dict(
        w1=pad2(w1f, Fp, Hp).astype(compute_dtype),
        b1=pad2(b1f, 1, Hp).astype(jnp.float32),
        w2=pad2(w2f, Hp, Hp).astype(compute_dtype),
        b2=pad2(b2f, 1, Hp).astype(jnp.float32),
        w3=pad2(w3, Hp, Op).astype(compute_dtype),
        b3=pad2(b3, 1, Op).astype(jnp.float32),
        dims=(F, H, O),
    )


def multi_adversarial_network(x, prepped, *, batch_tile=None, fk_target=512,
                              out_dtype=jnp.float32):
    """x: (B, in_feature) float.  prepped: output of prepare_params()."""
    B, in_feature = x.shape
    F, H, O = prepped["dims"]
    assert in_feature == F, "feature dim mismatch"
    Fp, Hp = prepped["w1"].shape
    Op = prepped["w3"].shape[1]

    # ---- batch tile selection -------------------------------------------
    Bp_min = _round_up(B, SUB)
    bt = batch_tile if batch_tile is not None else (256 if B >= 512 else 128)
    bt = _round_up(max(bt, SUB), SUB)
    bt = min(bt, Bp_min)
    # Guarantee >=2 grid steps whenever the batch allows it, so both v7x
    # TensorCores get work (negligible extra per-step cost on v5e/v6e).
    if Bp_min >= 2 * SUB:
        bt = min(bt, _round_up(Bp_min // 2, SUB))

    # ---- VMEM budget (generation-aware) and K-slab selection --------------
    vmem_cap = _vmem_capacity_bytes()
    budget = int(0.75 * vmem_cap)          # ~48 MiB on v7x, ~96 MiB on v5e/v6e

    w_isz = jnp.dtype(prepped["w1"].dtype).itemsize
    x_isz = jnp.dtype(x.dtype).itemsize
    o_isz = jnp.dtype(out_dtype).itemsize

    def vmem_need(bt_, fk_, inv_bufs=1, w1_bufs=2):
        return (w1_bufs * bt_ * fk_ * x_isz                    # streamed x slabs
                + w1_bufs * fk_ * Hp * w_isz                   # streamed w1 slabs
                + inv_bufs * (Hp * Hp + Hp * Op) * w_isz       # resident w2, w3
                + inv_bufs * (2 * Hp + Op) * 4                 # f32 biases
                + 2 * bt_ * Op * o_isz                         # out tiles
                + bt_ * Hp * 4)                                # f32 accumulator

    cands = [c for c in _fk_divisors(Fp) if c <= max(LANE, fk_target)]
    fk = cands[-1]
    for c in cands:                      # largest slab that fits the budget
        fk = c
        if vmem_need(bt, fk) <= budget:
            break
    while vmem_need(bt, fk) > budget and bt > SUB:
        bt = max(SUB, _round_up(bt // 2, SUB))
    # If even (bt=16, fk=128) exceeds the budget (enormous hidden), we clamp the
    # limit at the budget and let Mosaic report the overflow explicitly.

    Bp = _round_up(B, bt)
    grid = (Bp // bt, Fp // fk)

    # ---- input: pad only when actually needed (no extra cast pass) --------
    if (Bp, Fp) == (B, F):
        x_in = x
    else:
        x_in = jnp.pad(x, ((0, Bp - B), (0, Fp - F)))

    param_keys = ("w1", "b1", "w2", "b2", "w3", "b3")
    weight_bytes = sum(prepped[kk].size * prepped[kk].dtype.itemsize
                       for kk in param_keys)
    flops = 2 * Bp * (Fp * Hp + Hp * Hp + Hp * Op)
    bytes_accessed = (x_in.size * x_isz + weight_bytes + Bp * Op * o_isz)
    cost = pl.CostEstimate(flops=int(flops), transcendentals=0,
                           bytes_accessed=int(bytes_accessed))

    def build(inv_bufs):
        # Invariant parameter blocks (index_map == (0,0)): single-buffer them
        # so they don't cost 2x VMEM.  Streamed x/w1 slabs keep the default
        # double buffering (raise to Buffered(3) only if DMA shows exposed).
        pkw = {"pipeline_mode": pl.Buffered(1)} if inv_bufs == 1 else {}

        def inv(shape):
            return pl.BlockSpec(shape, lambda i, k: (0, 0), **pkw)

        in_specs = [
            pl.BlockSpec((bt, fk), lambda i, k: (i, k)),   # x slab (K-streamed)
            pl.BlockSpec((fk, Hp), lambda i, k: (k, 0)),   # w1 slab (K-streamed)
            inv((1, Hp)),                                  # b1'
            inv((Hp, Hp)),                                 # w2'
            inv((1, Hp)),                                  # b2'
            inv((Hp, Op)),                                 # w3
            inv((1, Op)),                                  # b3
        ]
        out_specs = pl.BlockSpec((bt, Op), lambda i, k: (i, 0))  # lane-dense out

        need = vmem_need(bt, fk, inv_bufs=inv_bufs)
        vmem_limit = int(min(budget, max(4 * 2**20, int(1.25 * need))))

        return pl.pallas_call(
            _mlp_kernel,
            out_shape=jax.ShapeDtypeStruct((Bp, Op), out_dtype),
            grid_spec=pltpu.PrefetchScalarGridSpec(
                num_scalar_prefetch=0,
                grid=grid,
                in_specs=in_specs,
                out_specs=out_specs,
                scratch_shapes=[pltpu.VMEM((bt, Hp), jnp.float32)],
            ),
            compiler_params=pltpu.CompilerParams(
                dimension_semantics=("parallel", "arbitrary"),
                vmem_limit_bytes=vmem_limit,
            ),
            cost_estimate=cost,
        )

    args = (x_in, prepped["w1"], prepped["b1"], prepped["w2"], prepped["b2"],
            prepped["w3"], prepped["b3"])
    try:
        y_p = build(inv_bufs=1)(*args)
    except Exception:
        # Fallback for jax versions rejecting Buffered(1) on pipelined inputs:
        # rebuild with default double buffering AND a budget recomputed for the
        # 2x invariant-weight footprint (not the optimistic 1x one).
        y_p = build(inv_bufs=2)(*args)

    if (Bp, Op) == (B, O):
        return y_p
    return y_p[:B, :O]


def init_params(key, in_feature, hidden, out_size):
    """Deterministic synthetic parameters (shapes match the PyTorch module)."""
    ks = jax.random.split(key, 8)

    def lin(kw, kb, fan_in, fan_out):
        bound = 1.0 / jnp.sqrt(fan_in)
        # PyTorch stores Linear weight as (out, in); we keep (in, out) = W.T
        w = jax.random.uniform(kw, (fan_in, fan_out), jnp.float32, -bound, bound)
        b = jax.random.uniform(kb, (1, fan_out), jnp.float32, -bound, bound)
        return w, b

    w1, b1 = lin(ks[0], ks[1], in_feature, hidden)
    w2, b2 = lin(ks[2], ks[3], hidden, hidden)
    w3, b3 = lin(ks[4], ks[5], hidden, out_size)

    def bn(k, h):
        k1, k2, k3 = jax.random.split(k, 3)
        gamma = 1.0 + 0.1 * jax.random.normal(k1, (1, h), jnp.float32)
        beta = 0.1 * jax.random.normal(k2, (1, h), jnp.float32)
        mean = 0.1 * jax.random.normal(k3, (1, h), jnp.float32)
        var = jnp.ones((1, h), jnp.float32) * 0.9
        return gamma, beta, mean, var

    g1, be1, m1, v1 = bn(ks[6], hidden)
    g2, be2, m2, v2 = bn(ks[7], hidden)

    return dict(w1=w1, b1=b1, g1=g1, be1=be1, m1=m1, v1=v1,
                w2=w2, b2=b2, g2=g2, be2=be2, m2=m2, v2=v2,
                w3=w3, b3=b3)


def _reference(x, p):
    """Pure-JAX f32 reference with the original (unfolded) semantics."""
    h = x @ p["w1"] + p["b1"]
    h = (h - p["m1"]) * (p["g1"] / jnp.sqrt(p["v1"] + EPS)) + p["be1"]
    h = jnp.maximum(h, 0.0)
    h = h @ p["w2"] + p["b2"]
    h = (h - p["m2"]) * (p["g2"] / jnp.sqrt(p["v2"] + EPS)) + p["be2"]
    h = jnp.maximum(h, 0.0)
    return h @ p["w3"] + p["b3"]


if __name__ == "__main__":
    B, in_feature, hidden, out_size = 16, 32, 64, 4

    key = jax.random.PRNGKey(0)
    kx, kp = jax.random.split(key)
    x = jax.random.normal(kx, (B, in_feature), jnp.float32)
    params = init_params(kp, in_feature, hidden, out_size)

    prepped = prepare_params(params)              # one-time BN fold + pad + bf16
    y = multi_adversarial_network(x, prepped)
    y = jax.block_until_ready(y)

    y_ref = _reference(x, params)
    assert y.shape == (B, out_size)
    max_err = float(jnp.max(jnp.abs(y - y_ref)))
    # bf16 weights/activations vs f32 reference -> loosened tolerance.
    assert jnp.allclose(y, y_ref, atol=2e-2, rtol=2e-2), f"mismatch: {max_err}"

    print("KERNEL_OK")
</pallas_src>

<mosaic_0001>
module attributes {stable_mosaic.version = 11 : i64} {
  func.func @_mlp_kernel(%arg0: i32, %arg1: i32, %arg2: memref<16x128xf32, #tpu.memory_space<vmem>>, %arg3: memref<128x128xbf16, #tpu.memory_space<vmem>>, %arg4: memref<1x128xf32, #tpu.memory_space<vmem>>, %arg5: memref<128x128xbf16, #tpu.memory_space<vmem>>, %arg6: memref<1x128xf32, #tpu.memory_space<vmem>>, %arg7: memref<128x128xbf16, #tpu.memory_space<vmem>>, %arg8: memref<1x128xf32, #tpu.memory_space<vmem>>, %arg9: memref<16x128xf32, #tpu.memory_space<vmem>>, %arg10: memref<16x128xf32, #tpu.memory_space<vmem>>) attributes {dimension_semantics = [#tpu.dimension_semantics<parallel>, #tpu.dimension_semantics<arbitrary>], iteration_bounds = array<i64: 1, 1>, scalar_prefetch = 0 : i64, scratch_operands = 1 : i64, tpu.core_type = #tpu.core_type<tc>, window_params = [{transform_indices = @transform_0, window_bounds = array<i64: 16, 128>}, {transform_indices = @transform_1, window_bounds = array<i64: 128, 128>}, {pipeline_mode = #tpu.pipeline_mode<synchronous>, transform_indices = @transform_2, window_bounds = array<i64: 1, 128>}, {pipeline_mode = #tpu.pipeline_mode<synchronous>, transform_indices = @transform_3, window_bounds = array<i64: 128, 128>}, {pipeline_mode = #tpu.pipeline_mode<synchronous>, transform_indices = @transform_4, window_bounds = array<i64: 1, 128>}, {pipeline_mode = #tpu.pipeline_mode<synchronous>, transform_indices = @transform_5, window_bounds = array<i64: 128, 128>}, {pipeline_mode = #tpu.pipeline_mode<synchronous>, transform_indices = @transform_6, window_bounds = array<i64: 1, 128>}, {transform_indices = @transform_7, window_bounds = array<i64: 16, 128>}]} {
    %c0_i32 = arith.constant 0 : i32
    %0 = arith.cmpi eq, %arg1, %c0_i32 : i32
    %1 = arith.extui %0 : i1 to i32
    %c0_i32_0 = arith.constant 0 : i32
    %2 = arith.cmpi ne, %1, %c0_i32_0 : i32
    scf.if %2 {
      %cst_10 = arith.constant 0.000000e+00 : f32
      %13 = vector.broadcast %cst_10 : f32 to vector<16x128xf32>
      %c0_11 = arith.constant 0 : index
      %c0_12 = arith.constant 0 : index
      %14 = vector.load %arg10[%c0_11, %c0_12] : memref<16x128xf32, #tpu.memory_space<vmem>>, vector<16x128xf32>
      tpu.vector_store %arg10[%c0_11, %c0_12], %13 {strides = array<i32>} : memref<16x128xf32, #tpu.memory_space<vmem>>, vector<16x128xf32>,
    } else {
    }
    %c0 = arith.constant 0 : index
    %c0_1 = arith.constant 0 : index
    %3 = vector.load %arg10[%c0, %c0_1] : memref<16x128xf32, #tpu.memory_space<vmem>>, vector<16x128xf32>
    %c0_2 = arith.constant 0 : index
    %c0_3 = arith.constant 0 : index
    %4 = vector.load %arg2[%c0_2, %c0_3] : memref<16x128xf32, #tpu.memory_space<vmem>>, vector<16x128xf32>
    %5 = arith.truncf %4 : vector<16x128xf32> to vector<16x128xbf16>
    %c0_4 = arith.constant 0 : index
    %c0_5 = arith.constant 0 : index
    %6 = vector.load %arg3[%c0_4, %c0_5] : memref<128x128xbf16, #tpu.memory_space<vmem>>, vector<128x128xbf16>
    %cst = arith.constant dense<0.000000e+00> : vector<16x128xf32>
    %7 = tpu.matmul %5, %6, %cst {dimension_numbers = #tpu.dot_dimension_numbers<[1], [0], [0], [1], [0, 0, 1, 1], [], []>} : vector<16x128xbf16>, vector<128x128xbf16>, vector<16x128xf32> -> vector<16x128xf32>
    %8 = arith.addf %3, %7 : vector<16x128xf32>
    %c0_6 = arith.constant 0 : index
    %c0_7 = arith.constant 0 : index
    %9 = vector.load %arg10[%c0_6, %c0_7] : memref<16x128xf32, #tpu.memory_space<vmem>>, vector<16x128xf32>
    tpu.vector_store %arg10[%c0_6, %c0_7], %8 {strides = array<i32>} : memref<16x128xf32, #tpu.memory_space<vmem>>, vector<16x128xf32>,
    %c0_i32_8 = arith.constant 0 : i32
    %10 = arith.cmpi eq, %arg1, %c0_i32_8 : i32
    %11 = arith.extui %10 : i1 to i32
    %c0_i32_9 = arith.constant 0 : i32
    %12 = arith.cmpi ne, %11, %c0_i32_9 : i32
    scf.if %12 {
      %c0_10 = arith.constant 0 : index
      %c0_11 = arith.constant 0 : index
      %13 = vector.load %arg10[%c0_10, %c0_11] : memref<16x128xf32, #tpu.memory_space<vmem>>, vector<16x128xf32>
      %c0_12 = arith.constant 0 : index
      %c0_13 = arith.constant 0 : index
      %14 = vector.load %arg4[%c0_12, %c0_13] : memref<1x128xf32, #tpu.memory_space<vmem>>, vector<1x128xf32>
      %15 = vector.broadcast %14 : vector<1x128xf32> to vector<16x128xf32>
      %16 = arith.addf %13, %15 : vector<16x128xf32>
      %cst_14 = arith.constant 0.000000e+00 : f32
      %17 = vector.broadcast %cst_14 : f32 to vector<16x128xf32>
      %18 = arith.maximumf %16, %17 : vector<16x128xf32>
      %19 = arith.truncf %18 : vector<16x128xf32> to vector<16x128xbf16>
      %c0_15 = arith.constant 0 : index
      %c0_16 = arith.constant 0 : index
      %20 = vector.load %arg5[%c0_15, %c0_16] : memref<128x128xbf16, #tpu.memory_space<vmem>>, vector<128x128xbf16>
      %cst_17 = arith.constant dense<0.000000e+00> : vector<16x128xf32>
      %21 = tpu.matmul %19, %20, %cst_17 {dimension_numbers = #tpu.dot_dimension_numbers<[1], [0], [0], [1], [0, 0, 1, 1], [], []>} : vector<16x128xbf16>, vector<128x128xbf16>, vector<16x128xf32> -> vector<16x128xf32>
      %c0_18 = arith.constant 0 : index
      %c0_19 = arith.constant 0 : index
      %22 = vector.load %arg6[%c0_18, %c0_19] : memref<1x128xf32, #tpu.memory_space<vmem>>, vector<1x128xf32>
      %23 = vector.broadcast %22 : vector<1x128xf32> to vector<16x128xf32>
      %24 = arith.addf %21, %23 : vector<16x128xf32>
      %cst_20 = arith.constant 0.000000e+00 : f32
      %25 = vector.broadcast %cst_20 : f32 to vector<16x128xf32>
      %26 = arith.maximumf %24, %25 : vector<16x128xf32>
      %27 = arith.truncf %26 : vector<16x128xf32> to vector<16x128xbf16>
      %c0_21 = arith.constant 0 : index
      %c0_22 = arith.constant 0 : index
      %28 = vector.load %arg7[%c0_21, %c0_22] : memref<128x128xbf16, #tpu.memory_space<vmem>>, vector<128x128xbf16>
      %cst_23 = arith.constant dense<0.000000e+00> : vector<16x128xf32>
      %29 = tpu.matmul %27, %28, %cst_23 {dimension_numbers = #tpu.dot_dimension_numbers<[1], [0], [0], [1], [0, 0, 1, 1], [], []>} : vector<16x128xbf16>, vector<128x128xbf16>, vector<16x128xf32> -> vector<16x128xf32>
      %c0_24 = arith.constant 0 : index
      %c0_25 = arith.constant 0 : index
      %30 = vector.load %arg8[%c0_24, %c0_25] : memref<1x128xf32, #tpu.memory_space<vmem>>, vector<1x128xf32>
      %31 = vector.broadcast %30 : vector<1x128xf32> to vector<16x128xf32>
      %32 = arith.addf %29, %31 : vector<16x128xf32>
      %c0_26 = arith.constant 0 : index
      %c0_27 = arith.constant 0 : index
      %33 = vector.load %arg9[%c0_26, %c0_27] : memref<16x128xf32, #tpu.memory_space<vmem>>, vector<16x128xf32>
      tpu.vector_store %arg9[%c0_26, %c0_27], %32 {strides = array<i32>} : memref<16x128xf32, #tpu.memory_space<vmem>>, vector<16x128xf32>,
    } else {
    }
    return
  }
  func.func @transform_0(%arg0: i32, %arg1: i32) -> (i32, i32) {
    %c0_i32 = arith.constant 0 : i32
    return %arg0, %arg1 : i32, i32
  }
  func.func @transform_1(%arg0: i32, %arg1: i32) -> (i32, i32) {
    %c0_i32 = arith.constant 0 : i32
    %c0_i32_0 = arith.constant 0 : i32
    return %arg1, %c0_i32 : i32, i32
  }
  func.func @transform_2(%arg0: i32, %arg1: i32) -> (i32, i32) {
    %c0_i32 = arith.constant 0 : i32
    %c0_i32_0 = arith.constant 0 : i32
    %c0_i32_1 = arith.constant 0 : i32
    return %c0_i32, %c0_i32_0 : i32, i32
  }
  func.func @transform_3(%arg0: i32, %arg1: i32) -> (i32, i32) {
    %c0_i32 = arith.constant 0 : i32
    %c0_i32_0 = arith.constant 0 : i32
    %c0_i32_1 = arith.constant 0 : i32
    return %c0_i32, %c0_i32_0 : i32, i32
  }
  func.func @transform_4(%arg0: i32, %arg1: i32) -> (i32, i32) {
    %c0_i32 = arith.constant 0 : i32
    %c0_i32_0 = arith.constant 0 : i32
    %c0_i32_1 = arith.constant 0 : i32
    return %c0_i32, %c0_i32_0 : i32, i32
  }
  func.func @transform_5(%arg0: i32, %arg1: i32) -> (i32, i32) {
    %c0_i32 = arith.constant 0 : i32
    %c0_i32_0 = arith.constant 0 : i32
    %c0_i32_1 = arith.constant 0 : i32
    return %c0_i32, %c0_i32_0 : i32, i32
  }
  func.func @transform_6(%arg0: i32, %arg1: i32) -> (i32, i32) {
    %c0_i32 = arith.constant 0 : i32
    %c0_i32_0 = arith.constant 0 : i32
    %c0_i32_1 = arith.constant 0 : i32
    return %c0_i32, %c0_i32_0 : i32, i32
  }
  func.func @transform_7(%arg0: i32, %arg1: i32) -> (i32, i32) {
    %c0_i32 = arith.constant 0 : i32
    %c0_i32_0 = arith.constant 0 : i32
    return %arg0, %c0_i32 : i32, i32
  }
}

module attributes {stable_mosaic.version = 11 : i64} {
  func.func @_mlp_kernel(%arg0: i32, %arg1: i32, %arg2: memref<16x128xf32, #tpu.memory_space<vmem>>, %arg3: memref<128x128xbf16, #tpu.memory_space<vmem>>, %arg4: memref<1x128xf32, #tpu.memory_space<vmem>>, %arg5: memref<128x128xbf16, #tpu.memory_space<vmem>>, %arg6: memref<1x128xf32, #tpu.memory_space<vmem>>, %arg7: memref<128x128xbf16, #tpu.memory_space<vmem>>, %arg8: memref<1x128xf32, #tpu.memory_space<vmem>>, %arg9: memref<16x128xf32, #tpu.memory_space<vmem>>, %arg10: memref<16x128xf32, #tpu.memory_space<vmem>>) attributes {dimension_semantics = [#tpu.dimension_semantics<parallel>, #tpu.dimension_semantics<arbitrary>], iteration_bounds = array<i64: 1, 1>, scalar_prefetch = 0 : i64, scratch_operands = 1 : i64, tpu.core_type = #tpu.core_type<tc>, window_params = [{transform_indices = @transform_0, window_bounds = array<i64: 16, 128>}, {transform_indices = @transform_1, window_bounds = array<i64: 128, 128>}, {pipeline_mode = #tpu.pipeline_mode<synchronous>, transform_indices = @transform_2, window_bounds = array<i64: 1, 128>}, {pipeline_mode = #tpu.pipeline_mode<synchronous>, transform_indices = @transform_3, window_bounds = array<i64: 128, 128>}, {pipeline_mode = #tpu.pipeline_mode<synchronous>, transform_indices = @transform_4, window_bounds = array<i64: 1, 128>}, {pipeline_mode = #tpu.pipeline_mode<synchronous>, transform_indices = @transform_5, window_bounds = array<i64: 128, 128>}, {pipeline_mode = #tpu.pipeline_mode<synchronous>, transform_indices = @transform_6, window_bounds = array<i64: 1, 128>}, {transform_indices = @transform_7, window_bounds = array<i64: 16, 128>}]} {
    %c0_i32 = arith.constant 0 : i32
    %0 = arith.cmpi eq, %arg1, %c0_i32 : i32
    %1 = arith.extui %0 : i1 to i32
    %c0_i32_0 = arith.constant 0 : i32
    %2 = arith.cmpi ne, %1, %c0_i32_0 : i32
    scf.if %2 {
      %cst_10 = arith.constant 0.000000e+00 : f32
      %13 = vector.broadcast %cst_10 : f32 to vector<16x128xf32>
      %c0_11 = arith.constant 0 : index
      %c0_12 = arith.constant 0 : index
      %14 = vector.load %arg10[%c0_11, %c0_12] : memref<16x128xf32, #tpu.memory_space<vmem>>, vector<16x128xf32>
      tpu.vector_store %arg10[%c0_11, %c0_12], %13 {strides = array<i32>} : memref<16x128xf32, #tpu.memory_space<vmem>>, vector<16x128xf32>,
    } else {
    }
    %c0 = arith.constant 0 : index
    %c0_1 = arith.constant 0 : index
    %3 = vector.load %arg10[%c0, %c0_1] : memref<16x128xf32, #tpu.memory_space<vmem>>, vector<16x128xf32>
    %c0_2 = arith.constant 0 : index
    %c0_3 = arith.constant 0 : index
    %4 = vector.load %arg2[%c0_2, %c0_3] : memref<16x128xf32, #tpu.memory_space<vmem>>, vector<16x128xf32>
    %5 = arith.truncf %4 : vector<16x128xf32> to vector<16x128xbf16>
    %c0_4 = arith.constant 0 : index
    %c0_5 = arith.constant 0 : index
    %6 = vector.load %arg3[%c0_4, %c0_5] : memref<128x128xbf16, #tpu.memory_space<vmem>>, vector<128x128xbf16>
    %cst = arith.constant dense<0.000000e+00> : vector<16x128xf32>
    %7 = tpu.matmul %5, %6, %cst {dimension_numbers = #tpu.dot_dimension_numbers<[1], [0], [0], [1], [0, 0, 1, 1], [], []>} : vector<16x128xbf16>, vector<128x128xbf16>, vector<16x128xf32> -> vector<16x128xf32>
    %8 = arith.addf %3, %7 : vector<16x128xf32>
    %c0_6 = arith.constant 0 : index
    %c0_7 = arith.constant 0 : index
    %9 = vector.load %arg10[%c0_6, %c0_7] : memref<16x128xf32, #tpu.memory_space<vmem>>, vector<16x128xf32>
    tpu.vector_store %arg10[%c0_6, %c0_7], %8 {strides = array<i32>} : memref<16x128xf32, #tpu.memory_space<vmem>>, vector<16x128xf32>,
    %c0_i32_8 = arith.constant 0 : i32
    %10 = arith.cmpi eq, %arg1, %c0_i32_8 : i32
    %11 = arith.extui %10 : i1 to i32
    %c0_i32_9 = arith.constant 0 : i32
    %12 = arith.cmpi ne, %11, %c0_i32_9 : i32
    scf.if %12 {
      %c0_10 = arith.constant 0 : index
      %c0_11 = arith.constant 0 : index
      %13 = vector.load %arg10[%c0_10, %c0_11] : memref<16x128xf32, #tpu.memory_space<vmem>>, vector<16x128xf32>
      %c0_12 = arith.constant 0 : index
      %c0_13 = arith.constant 0 : index
      %14 = vector.load %arg4[%c0_12, %c0_13] : memref<1x128xf32, #tpu.memory_space<vmem>>, vector<1x128xf32>
      %15 = vector.broadcast %14 : vector<1x128xf32> to vector<16x128xf32>
      %16 = arith.addf %13, %15 : vector<16x128xf32>
      %cst_14 = arith.constant 0.000000e+00 : f32
      %17 = vector.broadcast %cst_14 : f32 to vector<16x128xf32>
      %18 = arith.maximumf %16, %17 : vector<16x128xf32>
      %19 = arith.truncf %18 : vector<16x128xf32> to vector<16x128xbf16>
      %c0_15 = arith.constant 0 : index
      %c0_16 = arith.constant 0 : index
      %20 = vector.load %arg5[%c0_15, %c0_16] : memref<128x128xbf16, #tpu.memory_space<vmem>>, vector<128x128xbf16>
      %cst_17 = arith.constant dense<0.000000e+00> : vector<16x128xf32>
      %21 = tpu.matmul %19, %20, %cst_17 {dimension_numbers = #tpu.dot_dimension_numbers<[1], [0], [0], [1], [0, 0, 1, 1], [], []>} : vector<16x128xbf16>, vector<128x128xbf16>, vector<16x128xf32> -> vector<16x128xf32>
      %c0_18 = arith.constant 0 : index
      %c0_19 = arith.constant 0 : index
      %22 = vector.load %arg6[%c0_18, %c0_19] : memref<1x128xf32, #tpu.memory_space<vmem>>, vector<1x128xf32>
      %23 = vector.broadcast %22 : vector<1x128xf32> to vector<16x128xf32>
      %24 = arith.addf %21, %23 : vector<16x128xf32>
      %cst_20 = arith.constant 0.000000e+00 : f32
      %25 = vector.broadcast %cst_20 : f32 to vector<16x128xf32>
      %26 = arith.maximumf %24, %25 : vector<16x128xf32>
      %27 = arith.truncf %26 : vector<16x128xf32> to vector<16x128xbf16>
      %c0_21 = arith.constant 0 : index
      %c0_22 = arith.constant 0 : index
      %28 = vector.load %arg7[%c0_21, %c0_22] : memref<128x128xbf16, #tpu.memory_space<vmem>>, vector<128x128xbf16>
      %cst_23 = arith.constant dense<0.000000e+00> : vector<16x128xf32>
      %29 = tpu.matmul %27, %28, %cst_23 {dimension_numbers = #tpu.dot_dimension_numbers<[1], [0], [0], [1], [0, 0, 1, 1], [], []>} : vector<16x128xbf16>, vector<128x128xbf16>, vector<16x128xf32> -> vector<16x128xf32>
      %c0_24 = arith.constant 0 : index
      %c0_25 = arith.constant 0 : index
      %30 = vector.load %arg8[%c0_24, %c0_25] : memref<1x128xf32, #tpu.memory_space<vmem>>, vector<1x128xf32>
      %31 = vector.broadcast %30 : vector<1x128xf32> to vector<16x128xf32>
      %32 = arith.addf %29, %31 : vector<16x128xf32>
      %c0_26 = arith.constant 0 : index
      %c0_27 = arith.constant 0 : index
      %33 = vector.load %arg9[%c0_26, %c0_27] : memref<16x128xf32, #tpu.memory_space<vmem>>, vector<16x128xf32>
      tpu.vector_store %arg9[%c0_26, %c0_27], %32 {strides = array<i32>} : memref<16x128xf32, #tpu.memory_space<vmem>>, vector<16x128xf32>,
    } else {
    }
    return
  }
  func.func @transform_0(%arg0: i32, %arg1: i32) -> (i32, i32) {
    %c0_i32 = arith.constant 0 : i32
    return %arg0, %arg1 : i32, i32
  }
  func.func @transform_1(%arg0: i32, %arg1: i32) -> (i32, i32) {
    %c0_i32 = arith.constant 0 : i32
    %c0_i32_0 = arith.constant 0 : i32
    return %arg1, %c0_i32 : i32, i32
  }
  func.func @transform_2(%arg0: i32, %arg1: i32) -> (i32, i32) {
    %c0_i32 = arith.constant 0 : i32
    %c0_i32_0 = arith.constant 0 : i32
    %c0_i32_1 = arith.constant 0 : i32
    return %c0_i32, %c0_i32_0 : i32, i32
  }
  func.func @transform_3(%arg0: i32, %arg1: i32) -> (i32, i32) {
    %c0_i32 = arith.constant 0 : i32
    %c0_i32_0 = arith.constant 0 : i32
    %c0_i32_1 = arith.constant 0 : i32
    return %c0_i32, %c0_i32_0 : i32, i32
  }
  func.func @transform_4(%arg0: i32, %arg1: i32) -> (i32, i32) {
    %c0_i32 = arith.constant 0 : i32
    %c0_i32_0 = arith.constant 0 : i32
    %c0_i32_1 = arith.constant 0 : i32
    return %c0_i32, %c0_i32_0 : i32, i32
  }
  func.func @transform_5(%arg0: i32, %arg1: i32) -> (i32, i32) {
    %c0_i32 = arith.constant 0 : i32
    %c0_i32_0 = arith.constant 0 : i32
    %c0_i32_1 = arith.constant 0 : i32
    return %c0_i32, %c0_i32_0 : i32, i32
  }
  func.func @transform_6(%arg0: i32, %arg1: i32) -> (i32, i32) {
    %c0_i32 = arith.constant 0 : i32
    %c0_i32_0 = arith.constant 0 : i32
    %c0_i32_1 = arith.constant 0 : i32
    return %c0_i32, %c0_i32_0 : i32, i32
  }
  func.func @transform_7(%arg0: i32, %arg1: i32) -> (i32, i32) {
    %c0_i32 = arith.constant 0 : i32
    %c0_i32_0 = arith.constant 0 : i32
    return %arg0, %c0_i32 : i32, i32
  }
}

</mosaic_0001>

<llo_original>
// kernel: tpu_custom_call.1
$region0: #{tpu_custom_call.1}
  #allocation0 [shape = 'u32[]', space=smem, size = 0x4, offset = 0x4, fixed_abs, tag = 'smem constant byte address 0x4 - core index']
  #allocation1 [shape = 'u32[72,128]{1,0:T(1,128)}', space=vmem, size = 0x9000, scoped, tag = 'internal scratch']
  #allocation2 [shape = 'f32[16,128]{1,0:T(8,128)}', space=vmem, size = 0x2000, scoped, tag = 'scratch operand']
  %s0 = inlined_call_operand.hbm [shape: f32[16,128], index: 0, kind: input, shape index: {}]
  %s1 = inlined_call_operand.hbm [shape: bf16[128,128], index: 1, kind: input, shape index: {}]
  %s2 = inlined_call_operand.vmem [shape: f32[1,128], index: 2, kind: input, shape index: {}]
  %s3 = inlined_call_operand.hbm [shape: bf16[128,128], index: 3, kind: input, shape index: {}]
  %s4 = inlined_call_operand.vmem [shape: f32[1,128], index: 4, kind: input, shape index: {}]
  %s5 = inlined_call_operand.hbm [shape: bf16[128,128], index: 5, kind: input, shape index: {}]
  %s6 = inlined_call_operand.vmem [shape: f32[1,128], index: 6, kind: input, shape index: {}]
  %s7 = inlined_call_operand.hbm [shape: f32[16,128], index: 7, kind: output, shape index: {}]
  %s8 = sld [smem:[#allocation0]]
  $region62: #{tpu_custom_call.1} parent=0
    _
  %s10 = ssub.s32 1, %s8
  %s11 = scalar_select 0, %s10, %s8
  $region1: #{tpu_custom_call.1} parent=0
    #allocation3 [shape = 'u8[8192]{0}', space=vmem, size = 0x2000, scoped, tag = 'input window, operand 0, single buffered']
    #allocation4 [shape = 's32[1]{0}', space=sflag, size = 0x4, scoped, tag = 'scoped memory for tpu_custom_call.1']
    #allocation5 [shape = 's32[1]{0}', space=sflag, size = 0x4, scoped, tag = 'scoped memory for tpu_custom_call.1']
    #allocation6 [shape = 'u8[32768]{0}', space=vmem, size = 0x8000, scoped, tag = 'input window, operand 1, single buffered']
    #allocation7 [shape = 's32[1]{0}', space=sflag, size = 0x4, scoped, tag = 'scoped memory for tpu_custom_call.1']
    #allocation8 [shape = 'u8[32768]{0}', space=vmem, size = 0x8000, scoped, tag = 'input window, operand 3, single buffered']
    #allocation9 [shape = 'u8[32768]{0}', space=vmem, size = 0x8000, scoped, tag = 'input window, operand 5, single buffered']
    #allocation10 [shape = 's32[1]{0}', space=sflag, size = 0x4, scoped, tag = 'scoped memory for tpu_custom_call.1']
    #allocation11 [shape = 'u8[8192]{0}', space=vmem, size = 0x2000, scoped, tag = 'output window, operand 0, single buffered']
    %12 = vsyncpa [#allocation4], 0
    %13 = vsyncpa [#allocation7], 0
    %14 = vsyncpa [#allocation10], 0
    %15 = vsyncpa [#allocation5], 0
    // Predicated region
    $region2: #{tpu_custom_call.1} parent=1 // pred_check
      _
    $region3: #{tpu_custom_call.1} parent=1 // pred_check_branch
      %17 = sbr.rel (0) target = $region5
    $region4: #{tpu_custom_call.1} parent=1 // pred_region
      %19 = vsyncadd [#allocation4], 0
      %s20 = sshll.u32 %s0, 4
      %s21 = int_to_ptr.hbm [resolvable:$true] %s20
      %s22 = sshll.u32 [#allocation3], 4
      %s23 = int_to_ptr.vmem [resolvable:$true] %s22
      %28 = dma.hbm_to_vmem [thread:$0]  %s21, 256, %s23, [#allocation4], 128, 128, 8
    $region5: #{tpu_custom_call.1} parent=1 // pred_fallthru
      _
    // Predicated region
    $region6: #{tpu_custom_call.1} parent=1 // pred_check
      _
    $region7: #{tpu_custom_call.1} parent=1 // pred_check_branch
      %30 = sbr.rel (0) target = $region9
    $region8: #{tpu_custom_call.1} parent=1 // pred_region
      %32 = vsyncadd [#allocation7], 0
      %s33 = sshll.u32 %s1, 4
      %s34 = int_to_ptr.hbm [resolvable:$true] %s33
      %s35 = sshll.u32 [#allocation6], 4
      %s36 = int_to_ptr.vmem [resolvable:$true] %s35
      %41 = dma.hbm_to_vmem [thread:$0]  %s34, 1024, %s36, [#allocation7], 64, 64, 4
    $region9: #{tpu_custom_call.1} parent=1 // pred_fallthru
      _
    // Predicated region
    $region10: #{tpu_custom_call.1} parent=1 // pred_check
      _
    $region11: #{tpu_custom_call.1} parent=1 // pred_check_branch
      %43 = sbr.rel (0) target = $region13
    $region12: #{tpu_custom_call.1} parent=1 // pred_region
      _
    $region13: #{tpu_custom_call.1} parent=1 // pred_fallthru
      _
    // Predicated region
    $region14: #{tpu_custom_call.1} parent=1 // pred_check
      _
    $region15: #{tpu_custom_call.1} parent=1 // pred_check_branch
      %45 = sbr.rel (0) target = $region17
    $region16: #{tpu_custom_call.1} parent=1 // pred_region
      %47 = vsyncadd [#allocation7], 0
      %s48 = sshll.u32 %s3, 4
      %s49 = int_to_ptr.hbm [resolvable:$true] %s48
      %s50 = sshll.u32 [#allocation8], 4
      %s51 = int_to_ptr.vmem [resolvable:$true] %s50
      %56 = dma.hbm_to_vmem [thread:$0]  %s49, 1024, %s51, [#allocation7], 64, 64, 4
    $region17: #{tpu_custom_call.1} parent=1 // pred_fallthru
      _
    // Predicated region
    $region18: #{tpu_custom_call.1} parent=1 // pred_check
      _
    $region19: #{tpu_custom_call.1} parent=1 // pred_check_branch
      %58 = sbr.rel (0) target = $region21
    $region20: #{tpu_custom_call.1} parent=1 // pred_region
      _
    $region21: #{tpu_custom_call.1} parent=1 // pred_fallthru
      _
    // Predicated region
    $region22: #{tpu_custom_call.1} parent=1 // pred_check
      _
    $region23: #{tpu_custom_call.1} parent=1 // pred_check_branch
      %60 = sbr.rel (0) target = $region25
    $region24: #{tpu_custom_call.1} parent=1 // pred_region
      %62 = vsyncadd [#allocation10], 0
      %s63 = sshll.u32 %s5, 4
      %s64 = int_to_ptr.hbm [resolvable:$true] %s63
      %s65 = sshll.u32 [#allocation9], 4
      %s66 = int_to_ptr.vmem [resolvable:$true] %s65
      %71 = dma.hbm_to_vmem [thread:$0]  %s64, 1024, %s66, [#allocation10], 64, 64, 4
    $region25: #{tpu_custom_call.1} parent=1 // pred_fallthru
      _
    // Predicated region
    $region26: #{tpu_custom_call.1} parent=1 // pred_check
      _
    $region27: #{tpu_custom_call.1} parent=1 // pred_check_branch
      %73 = sbr.rel (0) target = $region29
    $region28: #{tpu_custom_call.1} parent=1 // pred_region
      _
    $region29: #{tpu_custom_call.1} parent=1 // pred_fallthru
      _
    // Predicated region
    $region30: #{tpu_custom_call.1} parent=1 // pred_check
      _
    $region31: #{tpu_custom_call.1} parent=1 // pred_check_branch
      %75 = sbr.rel (0) target = $region33
    $region32: #{tpu_custom_call.1} parent=1 // pred_region
      %77 = dma.done [#allocation4], 256
    $region33: #{tpu_custom_call.1} parent=1 // pred_fallthru
      _
    // Predicated region
    $region34: #{tpu_custom_call.1} parent=1 // pred_check
      _
    $region35: #{tpu_custom_call.1} parent=1 // pred_check_branch
      %79 = sbr.rel (0) target = $region37
    $region36: #{tpu_custom_call.1} parent=1 // pred_region
      %81 = dma.done [#allocation7], 1024
    $region37: #{tpu_custom_call.1} parent=1 // pred_fallthru
      _
    // Predicated region
    $region38: #{tpu_custom_call.1} parent=1 // pred_check
      _
    $region39: #{tpu_custom_call.1} parent=1 // pred_check_branch
      %83 = sbr.rel (0) target = $region41
    $region40: #{tpu_custom_call.1} parent=1 // pred_region
      %85 = dma.done [#allocation7], 1024
    $region41: #{tpu_custom_call.1} parent=1 // pred_fallthru
      _
    // Predicated region
    $region42: #{tpu_custom_call.1} parent=1 // pred_check
      _
    $region43: #{tpu_custom_call.1} parent=1 // pred_check_branch
      %87 = sbr.rel (0) target = $region45
    $region44: #{tpu_custom_call.1} parent=1 // pred_region
      %89 = dma.done [#allocation10], 1024
    $region45: #{tpu_custom_call.1} parent=1 // pred_fallthru
      _
    %p90 = scmp.eq.s32.totalorder 0, 0
    // Predicated region
    $region46: #{tpu_custom_call.1} parent=1 // pred_check
      %p91 = pneg %p90
    $region47: #{tpu_custom_call.1} parent=1 // pred_check_branch
      %93 = sbr.rel (%p91) target = $region49
    $region48: #{tpu_custom_call.1} parent=1 // pred_region
      %94 = vst [vmem:[#allocation2] sm:$0xff] 0.0
      %95 = vst [vmem:[#allocation2 + $0x8] sm:$0xff] 0.0
    $region49: #{tpu_custom_call.1} parent=1 // pred_fallthru
      _
    %v96 = vld [vmem:[#allocation2] sm:$0xff]
    %v97 = vld [vmem:[#allocation2 + $0x8] sm:$0xff]
    %v98 = vld [vmem:[#allocation3] sm:$0xff]
    %v99 = vld [vmem:[#allocation3 + $0x8] sm:$0xff]
    %v100 = vpack.c.bf16 %v99, %v98
    %v101 = vld [vmem:[#allocation6] sm:$0xf]
    %v102 = vld [vmem:[#allocation6 + $0x4] sm:$0xf]
    %v103 = vld [vmem:[#allocation6 + $0x8] sm:$0xf]
    %v104 = vld [vmem:[#allocation6 + $0xc] sm:$0xf]
    %v105 = vld [vmem:[#allocation6 + $0x10] sm:$0xf]
    %v106 = vld [vmem:[#allocation6 + $0x14] sm:$0xf]
    %v107 = vld [vmem:[#allocation6 + $0x18] sm:$0xf]
    %v108 = vld [vmem:[#allocation6 + $0x1c] sm:$0xf]
    %v109 = vld [vmem:[#allocation6 + $0x20] sm:$0xf]
    %v110 = vld [vmem:[#allocation6 + $0x24] sm:$0xf]
    %v111 = vld [vmem:[#allocation6 + $0x28] sm:$0xf]
    %v112 = vld [vmem:[#allocation6 + $0x2c] sm:$0xf]
    %v113 = vld [vmem:[#allocation6 + $0x30] sm:$0xf]
    %v114 = vld [vmem:[#allocation6 + $0x34] sm:$0xf]
    %v115 = vld [vmem:[#allocation6 + $0x38] sm:$0xf]
    %v116 = vld [vmem:[#allocation6 + $0x3c] sm:$0xf]
    %v133 = vunpack.c.l.b16 %v101
    %v134 = vunpack.c.l.b16 %v102
    %v135 = vunpack.c.l.b16 %v103
    %v136 = vunpack.c.l.b16 %v104
    %v137 = vunpack.c.l.b16 %v105
    %v138 = vunpack.c.l.b16 %v106
    %v139 = vunpack.c.l.b16 %v107
    %v140 = vunpack.c.l.b16 %v108
    %v141 = vunpack.c.l.b16 %v109
    %v142 = vunpack.c.l.b16 %v110
    %v143 = vunpack.c.l.b16 %v111
    %v144 = vunpack.c.l.b16 %v112
    %v145 = vunpack.c.l.b16 %v113
    %v146 = vunpack.c.l.b16 %v114
    %v147 = vunpack.c.l.b16 %v115
    %v148 = vunpack.c.l.b16 %v116
    %v149 = vpack.c.b16 %v134, %v133
    %v150 = vpack.c.b16 %v136, %v135
    %v151 = vpack.c.b16 %v138, %v137
    %v152 = vpack.c.b16 %v140, %v139
    %v153 = vpack.c.b16 %v142, %v141
    %v154 = vpack.c.b16 %v144, %v143
    %v155 = vpack.c.b16 %v146, %v145
    %v156 = vpack.c.b16 %v148, %v147
    %165 = vmatpush.bf16.msra.mxu0 %v156
    %166 = vmatpush.bf16.msra.mxu0 %v155
    %167 = vmatpush.bf16.msra.mxu0 %v154
    %168 = vmatpush.bf16.msra.mxu0 %v153
    %169 = vmatpush.bf16.msra.mxu0 %v152
    %170 = vmatpush.bf16.msra.mxu0 %v151
    %171 = vmatpush.bf16.msra.mxu0 %v150
    %172 = vmatpush.bf16.msra.mxu0 %v149
    %173 = vmatmul.bf16.gmra.mxu0 %v100
    %v174 = vpop.f32.mrf.mxu0
    %v175 = vadd.f32 0.0, %v174
    %v176 = vpop.f32.mrf.mxu0
    %v177 = vadd.f32 0.0, %v176
    %178 = vdwg.mxu0
    %v179 = vadd.f32 %v96, %v175
    %v180 = vadd.f32 %v97, %v177
    %181 = vst [vmem:[#allocation2] sm:$0xff] %v179
    %182 = vst [vmem:[#allocation2 + $0x8] sm:$0xff] %v180
    // Predicated region
    $region50: #{tpu_custom_call.1} parent=1 // pred_check
      %p183 = pneg %p90
    $region51: #{tpu_custom_call.1} parent=1 // pred_check_branch
      %185 = sbr.rel (%p183) target = $region53
    $region52: #{tpu_custom_call.1} parent=1 // pred_region
      %v186 = vld [vmem:[#allocation2] sm:$0xff]
      %v187 = vld [vmem:[#allocation2 + $0x8] sm:$0xff]
      %v188 = vld [vmem:[%s2] sm:$0x1]
      %v190 = vperm.slane %v188, 0
      %v192 = vadd.f32 %v186, %v190
      %v193 = vadd.f32 %v187, %v190
      %v194 = vmax.f32 %v192, 0.0
      %v195 = vmax.f32 %v193, 0.0
      %v196 = vpack.c.bf16 %v195, %v194
      %v197 = vld [vmem:[#allocation8] sm:$0xf]
      %v198 = vld [vmem:[#allocation8 + $0x4] sm:$0xf]
      %v199 = vld [vmem:[#allocation8 + $0x8] sm:$0xf]
      %v200 = vld [vmem:[#allocation8 + $0xc] sm:$0xf]
      %v201 = vld [vmem:[#allocation8 + $0x10] sm:$0xf]
      %v202 = vld [vmem:[#allocation8 + $0x14] sm:$0xf]
      %v203 = vld [vmem:[#allocation8 + $0x18] sm:$0xf]
      %v204 = vld [vmem:[#allocation8 + $0x1c] sm:$0xf]
      %v205 = vld [vmem:[#allocation8 + $0x20] sm:$0xf]
      %v206 = vld [vmem:[#allocation8 + $0x24] sm:$0xf]
      %v207 = vld [vmem:[#allocation8 + $0x28] sm:$0xf]
      %v208 = vld [vmem:[#allocation8 + $0x2c] sm:$0xf]
      %v209 = vld [vmem:[#allocation8 + $0x30] sm:$0xf]
      %v210 = vld [vmem:[#allocation8 + $0x34] sm:$0xf]
      %v211 = vld [vmem:[#allocation8 + $0x38] sm:$0xf]
      %v212 = vld [vmem:[#allocation8 + $0x3c] sm:$0xf]
      %v213 = vld [vmem:[%s4] sm:$0x1]
      %v215 = vperm.slane %v213, 0
      %v233 = vunpack.c.l.b16 %v197
      %v234 = vunpack.c.l.b16 %v198
      %v235 = vunpack.c.l.b16 %v199
      %v236 = vunpack.c.l.b16 %v200
      %v237 = vunpack.c.l.b16 %v201
      %v238 = vunpack.c.l.b16 %v202
      %v239 = vunpack.c.l.b16 %v203
      %v240 = vunpack.c.l.b16 %v204
      %v241 = vunpack.c.l.b16 %v205
      %v242 = vunpack.c.l.b16 %v206
      %v243 = vunpack.c.l.b16 %v207
      %v244 = vunpack.c.l.b16 %v208
      %v245 = vunpack.c.l.b16 %v209
      %v246 = vunpack.c.l.b16 %v210
      %v247 = vunpack.c.l.b16 %v211
      %v248 = vunpack.c.l.b16 %v212
      %v249 = vpack.c.b16 %v234, %v233
      %v250 = vpack.c.b16 %v236, %v235
      %v251 = vpack.c.b16 %v238, %v237
      %v252 = vpack.c.b16 %v240, %v239
      %v253 = vpack.c.b16 %v242, %v241
      %v254 = vpack.c.b16 %v244, %v243
      %v255 = vpack.c.b16 %v246, %v245
      %v256 = vpack.c.b16 %v248, %v247
      %265 = vmatpush.bf16.msra.mxu0 %v256
      %266 = vmatpush.bf16.msra.mxu0 %v255
      %267 = vmatpush.bf16.msra.mxu0 %v254
      %268 = vmatpush.bf16.msra.mxu0 %v253
      %269 = vmatpush.bf16.msra.mxu0 %v252
      %270 = vmatpush.bf16.msra.mxu0 %v251
      %271 = vmatpush.bf16.msra.mxu0 %v250
      %272 = vmatpush.bf16.msra.mxu0 %v249
      %273 = vmatmul.bf16.gmra.mxu0 %v196
      %v274 = vpop.f32.mrf.mxu0
      %v275 = vadd.f32 %v215, %v274
      %v276 = vpop.f32.mrf.mxu0
      %v277 = vadd.f32 %v215, %v276
      %278 = vdwg.mxu0
      %v279 = vmax.f32 %v275, 0.0
      %v280 = vmax.f32 %v277, 0.0
      %v281 = vpack.c.bf16 %v280, %v279
      %v282 = vld [vmem:[#allocation9] sm:$0xf]
      %v283 = vld [vmem:[#allocation9 + $0x4] sm:$0xf]
      %v284 = vld [vmem:[#allocation9 + $0x8] sm:$0xf]
      %v285 = vld [vmem:[#allocation9 + $0xc] sm:$0xf]
      %v286 = vld [vmem:[#allocation9 + $0x10] sm:$0xf]
      %v287 = vld [vmem:[#allocation9 + $0x14] sm:$0xf]
      %v288 = vld [vmem:[#allocation9 + $0x18] sm:$0xf]
      %v289 = vld [vmem:[#allocation9 + $0x1c] sm:$0xf]
      %v290 = vld [vmem:[#allocation9 + $0x20] sm:$0xf]
      %v291 = vld [vmem:[#allocation9 + $0x24] sm:$0xf]
      %v292 = vld [vmem:[#allocation9 + $0x28] sm:$0xf]
      %v293 = vld [vmem:[#allocation9 + $0x2c] sm:$0xf]
      %v294 = vld [vmem:[#allocation9 + $0x30] sm:$0xf]
      %v295 = vld [vmem:[#allocation9 + $0x34] sm:$0xf]
      %v296 = vld [vmem:[#allocation9 + $0x38] sm:$0xf]
      %v297 = vld [vmem:[#allocation9 + $0x3c] sm:$0xf]
      %v298 = vld [vmem:[%s6] sm:$0x1]
      %v300 = vperm.slane %v298, 0
      %v318 = vunpack.c.l.b16 %v282
      %v319 = vunpack.c.l.b16 %v283
      %v320 = vunpack.c.l.b16 %v284
      %v321 = vunpack.c.l.b16 %v285
      %v322 = vunpack.c.l.b16 %v286
      %v323 = vunpack.c.l.b16 %v287
      %v324 = vunpack.c.l.b16 %v288
      %v325 = vunpack.c.l.b16 %v289
      %v326 = vunpack.c.l.b16 %v290
      %v327 = vunpack.c.l.b16 %v291
      %v328 = vunpack.c.l.b16 %v292
      %v329 = vunpack.c.l.b16 %v293
      %v330 = vunpack.c.l.b16 %v294
      %v331 = vunpack.c.l.b16 %v295
      %v332 = vunpack.c.l.b16 %v296
      %v333 = vunpack.c.l.b16 %v297
      %v334 = vpack.c.b16 %v319, %v318
      %v335 = vpack.c.b16 %v321, %v320
      %v336 = vpack.c.b16 %v323, %v322
      %v337 = vpack.c.b16 %v325, %v324
      %v338 = vpack.c.b16 %v327, %v326
      %v339 = vpack.c.b16 %v329, %v328
      %v340 = vpack.c.b16 %v331, %v330
      %v341 = vpack.c.b16 %v333, %v332
      %350 = vmatpush.bf16.msra.mxu0 %v341
      %351 = vmatpush.bf16.msra.mxu0 %v340
      %352 = vmatpush.bf16.msra.mxu0 %v339
      %353 = vmatpush.bf16.msra.mxu0 %v338
      %354 = vmatpush.bf16.msra.mxu0 %v337
      %355 = vmatpush.bf16.msra.mxu0 %v336
      %356 = vmatpush.bf16.msra.mxu0 %v335
      %357 = vmatpush.bf16.msra.mxu0 %v334
      %358 = vmatmul.bf16.gmra.mxu0 %v281
      %v359 = vpop.f32.mrf.mxu0
      %v360 = vadd.f32 %v300, %v359
      %v361 = vpop.f32.mrf.mxu0
      %v362 = vadd.f32 %v300, %v361
      %363 = vdwg.mxu0
      %364 = vst [vmem:[#allocation11] sm:$0xff] %v360
      %365 = vst [vmem:[#allocation11 + $0x8] sm:$0xff] %v362
    $region53: #{tpu_custom_call.1} parent=1 // pred_fallthru
      _
    // Predicated region
    $region54: #{tpu_custom_call.1} parent=1 // pred_check
      _
    $region55: #{tpu_custom_call.1} parent=1 // pred_check_branch
      %367 = sbr.rel (0) target = $region57
    $region56: #{tpu_custom_call.1} parent=1 // pred_region
      %369 = vsyncadd [#allocation5], 0
      %s370 = sshll.u32 [#allocation11], 4
      %s371 = int_to_ptr.vmem [resolvable:$true] %s370
      %s372 = sshll.u32 %s7, 4
      %s373 = int_to_ptr.hbm [resolvable:$true] %s372
      %378 = dma.vmem_to_hbm [thread:$0]  %s371, 256, %s373, [#allocation5], 128, 128, 8
    $region57: #{tpu_custom_call.1} parent=1 // pred_fallthru
      _
    // Predicated region
    $region58: #{tpu_custom_call.1} parent=1 // pred_check
      _
    $region59: #{tpu_custom_call.1} parent=1 // pred_check_branch
      %380 = sbr.rel (0) target = $region61
    $region60: #{tpu_custom_call.1} parent=1 // pred_region
      %382 = dma.done [#allocation5], 256
    $region61: #{tpu_custom_call.1} parent=1 // pred_fallthru
      _
    %383 = vsyncpa [#allocation4], 1
    %384 = vsyncpa [#allocation7], 1
    %385 = vsyncpa [#allocation10], 1
    %386 = vsyncpa [#allocation5], 1

// kernel: tpu_custom_call.1
$region0: #{tpu_custom_call.1}
  #allocation0 [shape = 'u32[]', space=smem, size = 0x4, offset = 0x4, fixed_abs, tag = 'smem constant byte address 0x4 - core index']
  #allocation1 [shape = 'u32[72,128]{1,0:T(1,128)}', space=vmem, size = 0x9000, scoped, tag = 'internal scratch']
  #allocation2 [shape = 'f32[16,128]{1,0:T(8,128)}', space=vmem, size = 0x2000, scoped, tag = 'scratch operand']
  %s0 = inlined_call_operand.hbm [shape: f32[16,128], index: 0, kind: input, shape index: {}]
  %s1 = inlined_call_operand.hbm [shape: bf16[128,128], index: 1, kind: input, shape index: {}]
  %s2 = inlined_call_operand.vmem [shape: f32[1,128], index: 2, kind: input, shape index: {}]
  %s3 = inlined_call_operand.hbm [shape: bf16[128,128], index: 3, kind: input, shape index: {}]
  %s4 = inlined_call_operand.vmem [shape: f32[1,128], index: 4, kind: input, shape index: {}]
  %s5 = inlined_call_operand.hbm [shape: bf16[128,128], index: 5, kind: input, shape index: {}]
  %s6 = inlined_call_operand.vmem [shape: f32[1,128], index: 6, kind: input, shape index: {}]
  %s7 = inlined_call_operand.hbm [shape: f32[16,128], index: 7, kind: output, shape index: {}]
  %s8 = sld [smem:[#allocation0]]
  $region62: #{tpu_custom_call.1} parent=0
    _
  %s10 = ssub.s32 1, %s8
  %s11 = scalar_select 0, %s10, %s8
  $region1: #{tpu_custom_call.1} parent=0
    #allocation3 [shape = 'u8[8192]{0}', space=vmem, size = 0x2000, scoped, tag = 'input window, operand 0, single buffered']
    #allocation4 [shape = 's32[1]{0}', space=sflag, size = 0x4, scoped, tag = 'scoped memory for tpu_custom_call.1']
    #allocation5 [shape = 's32[1]{0}', space=sflag, size = 0x4, scoped, tag = 'scoped memory for tpu_custom_call.1']
    #allocation6 [shape = 'u8[32768]{0}', space=vmem, size = 0x8000, scoped, tag = 'input window, operand 1, single buffered']
    #allocation7 [shape = 's32[1]{0}', space=sflag, size = 0x4, scoped, tag = 'scoped memory for tpu_custom_call.1']
    #allocation8 [shape = 'u8[32768]{0}', space=vmem, size = 0x8000, scoped, tag = 'input window, operand 3, single buffered']
    #allocation9 [shape = 'u8[32768]{0}', space=vmem, size = 0x8000, scoped, tag = 'input window, operand 5, single buffered']
    #allocation10 [shape = 's32[1]{0}', space=sflag, size = 0x4, scoped, tag = 'scoped memory for tpu_custom_call.1']
    #allocation11 [shape = 'u8[8192]{0}', space=vmem, size = 0x2000, scoped, tag = 'output window, operand 0, single buffered']
    %12 = vsyncpa [#allocation4], 0
    %13 = vsyncpa [#allocation7], 0
    %14 = vsyncpa [#allocation10], 0
    %15 = vsyncpa [#allocation5], 0
    // Predicated region
    $region2: #{tpu_custom_call.1} parent=1 // pred_check
      _
    $region3: #{tpu_custom_call.1} parent=1 // pred_check_branch
      %17 = sbr.rel (0) target = $region5
    $region4: #{tpu_custom_call.1} parent=1 // pred_region
      %19 = vsyncadd [#allocation4], 0
      %s20 = sshll.u32 %s0, 4
      %s21 = int_to_ptr.hbm [resolvable:$true] %s20
      %s22 = sshll.u32 [#allocation3], 4
      %s23 = int_to_ptr.vmem [resolvable:$true] %s22
      %28 = dma.hbm_to_vmem [thread:$0]  %s21, 256, %s23, [#allocation4], 128, 128, 8
    $region5: #{tpu_custom_call.1} parent=1 // pred_fallthru
      _
    // Predicated region
    $region6: #{tpu_custom_call.1} parent=1 // pred_check
      _
    $region7: #{tpu_custom_call.1} parent=1 // pred_check_branch
      %30 = sbr.rel (0) target = $region9
    $region8: #{tpu_custom_call.1} parent=1 // pred_region
      %32 = vsyncadd [#allocation7], 0
      %s33 = sshll.u32 %s1, 4
      %s34 = int_to_ptr.hbm [resolvable:$true] %s33
      %s35 = sshll.u32 [#allocation6], 4
      %s36 = int_to_ptr.vmem [resolvable:$true] %s35
      %41 = dma.hbm_to_vmem [thread:$0]  %s34, 1024, %s36, [#allocation7], 64, 64, 4
    $region9: #{tpu_custom_call.1} parent=1 // pred_fallthru
      _
    // Predicated region
    $region10: #{tpu_custom_call.1} parent=1 // pred_check
      _
    $region11: #{tpu_custom_call.1} parent=1 // pred_check_branch
      %43 = sbr.rel (0) target = $region13
    $region12: #{tpu_custom_call.1} parent=1 // pred_region
      _
    $region13: #{tpu_custom_call.1} parent=1 // pred_fallthru
      _
    // Predicated region
    $region14: #{tpu_custom_call.1} parent=1 // pred_check
      _
    $region15: #{tpu_custom_call.1} parent=1 // pred_check_branch
      %45 = sbr.rel (0) target = $region17
    $region16: #{tpu_custom_call.1} parent=1 // pred_region
      %47 = vsyncadd [#allocation7], 0
      %s48 = sshll.u32 %s3, 4
      %s49 = int_to_ptr.hbm [resolvable:$true] %s48
      %s50 = sshll.u32 [#allocation8], 4
      %s51 = int_to_ptr.vmem [resolvable:$true] %s50
      %56 = dma.hbm_to_vmem [thread:$0]  %s49, 1024, %s51, [#allocation7], 64, 64, 4
    $region17: #{tpu_custom_call.1} parent=1 // pred_fallthru
      _
    // Predicated region
    $region18: #{tpu_custom_call.1} parent=1 // pred_check
      _
    $region19: #{tpu_custom_call.1} parent=1 // pred_check_branch
      %58 = sbr.rel (0) target = $region21
    $region20: #{tpu_custom_call.1} parent=1 // pred_region
      _
    $region21: #{tpu_custom_call.1} parent=1 // pred_fallthru
      _
    // Predicated region
    $region22: #{tpu_custom_call.1} parent=1 // pred_check
      _
    $region23: #{tpu_custom_call.1} parent=1 // pred_check_branch
      %60 = sbr.rel (0) target = $region25
    $region24: #{tpu_custom_call.1} parent=1 // pred_region
      %62 = vsyncadd [#allocation10], 0
      %s63 = sshll.u32 %s5, 4
      %s64 = int_to_ptr.hbm [resolvable:$true] %s63
      %s65 = sshll.u32 [#allocation9], 4
      %s66 = int_to_ptr.vmem [resolvable:$true] %s65
      %71 = dma.hbm_to_vmem [thread:$0]  %s64, 1024, %s66, [#allocation10], 64, 64, 4
    $region25: #{tpu_custom_call.1} parent=1 // pred_fallthru
      _
    // Predicated region
    $region26: #{tpu_custom_call.1} parent=1 // pred_check
      _
    $region27: #{tpu_custom_call.1} parent=1 // pred_check_branch
      %73 = sbr.rel (0) target = $region29
    $region28: #{tpu_custom_call.1} parent=1 // pred_region
      _
    $region29: #{tpu_custom_call.1} parent=1 // pred_fallthru
      _
    // Predicated region
    $region30: #{tpu_custom_call.1} parent=1 // pred_check
      _
    $region31: #{tpu_custom_call.1} parent=1 // pred_check_branch
      %75 = sbr.rel (0) target = $region33
    $region32: #{tpu_custom_call.1} parent=1 // pred_region
      %77 = dma.done [#allocation4], 256
    $region33: #{tpu_custom_call.1} parent=1 // pred_fallthru
      _
    // Predicated region
    $region34: #{tpu_custom_call.1} parent=1 // pred_check
      _
    $region35: #{tpu_custom_call.1} parent=1 // pred_check_branch
      %79 = sbr.rel (0) target = $region37
    $region36: #{tpu_custom_call.1} parent=1 // pred_region
      %81 = dma.done [#allocation7], 1024
    $region37: #{tpu_custom_call.1} parent=1 // pred_fallthru
      _
    // Predicated region
    $region38: #{tpu_custom_call.1} parent=1 // pred_check
      _
    $region39: #{tpu_custom_call.1} parent=1 // pred_check_branch
      %83 = sbr.rel (0) target = $region41
    $region40: #{tpu_custom_call.1} parent=1 // pred_region
      %85 = dma.done [#allocation7], 1024
    $region41: #{tpu_custom_call.1} parent=1 // pred_fallthru
      _
    // Predicated region
    $region42: #{tpu_custom_call.1} parent=1 // pred_check
      _
    $region43: #{tpu_custom_call.1} parent=1 // pred_check_branch
      %87 = sbr.rel (0) target = $region45
    $region44: #{tpu_custom_call.1} parent=1 // pred_region
      %89 = dma.done [#allocation10], 1024
    $region45: #{tpu_custom_call.1} parent=1 // pred_fallthru
      _
    %p90 = scmp.eq.s32.totalorder 0, 0
    // Predicated region
    $region46: #{tpu_custom_call.1} parent=1 // pred_check
      %p91 = pneg %p90
    $region47: #{tpu_custom_call.1} parent=1 // pred_check_branch
      %93 = sbr.rel (%p91) target = $region49
    $region48: #{tpu_custom_call.1} parent=1 // pred_region
      %94 = vst [vmem:[#allocation2] sm:$0xff] 0.0
      %95 = vst [vmem:[#allocation2 + $0x8] sm:$0xff] 0.0
    $region49: #{tpu_custom_call.1} parent=1 // pred_fallthru
      _
    %v96 = vld [vmem:[#allocation2] sm:$0xff]
    %v97 = vld [vmem:[#allocation2 + $0x8] sm:$0xff]
    %v98 = vld [vmem:[#allocation3] sm:$0xff]
    %v99 = vld [vmem:[#allocation3 + $0x8] sm:$0xff]
    %v100 = vpack.c.bf16 %v99, %v98
    %v101 = vld [vmem:[#allocation6] sm:$0xf]
    %v102 = vld [vmem:[#allocation6 + $0x4] sm:$0xf]
    %v103 = vld [vmem:[#allocation6 + $0x8] sm:$0xf]
    %v104 = vld [vmem:[#allocation6 + $0xc] sm:$0xf]
    %v105 = vld [vmem:[#allocation6 + $0x10] sm:$0xf]
    %v106 = vld [vmem:[#allocation6 + $0x14] sm:$0xf]
    %v107 = vld [vmem:[#allocation6 + $0x18] sm:$0xf]
    %v108 = vld [vmem:[#allocation6 + $0x1c] sm:$0xf]
    %v109 = vld [vmem:[#allocation6 + $0x20] sm:$0xf]
    %v110 = vld [vmem:[#allocation6 + $0x24] sm:$0xf]
    %v111 = vld [vmem:[#allocation6 + $0x28] sm:$0xf]
    %v112 = vld [vmem:[#allocation6 + $0x2c] sm:$0xf]
    %v113 = vld [vmem:[#allocation6 + $0x30] sm:$0xf]
    %v114 = vld [vmem:[#allocation6 + $0x34] sm:$0xf]
    %v115 = vld [vmem:[#allocation6 + $0x38] sm:$0xf]
    %v116 = vld [vmem:[#allocation6 + $0x3c] sm:$0xf]
    %v133 = vunpack.c.l.b16 %v101
    %v134 = vunpack.c.l.b16 %v102
    %v135 = vunpack.c.l.b16 %v103
    %v136 = vunpack.c.l.b16 %v104
    %v137 = vunpack.c.l.b16 %v105
    %v138 = vunpack.c.l.b16 %v106
    %v139 = vunpack.c.l.b16 %v107
    %v140 = vunpack.c.l.b16 %v108
    %v141 = vunpack.c.l.b16 %v109
    %v142 = vunpack.c.l.b16 %v110
    %v143 = vunpack.c.l.b16 %v111
    %v144 = vunpack.c.l.b16 %v112
    %v145 = vunpack.c.l.b16 %v113
    %v146 = vunpack.c.l.b16 %v114
    %v147 = vunpack.c.l.b16 %v115
    %v148 = vunpack.c.l.b16 %v116
    %v149 = vpack.c.b16 %v134, %v133
    %v150 = vpack.c.b16 %v136, %v135
    %v151 = vpack.c.b16 %v138, %v137
    %v152 = vpack.c.b16 %v140, %v139
    %v153 = vpack.c.b16 %v142, %v141
    %v154 = vpack.c.b16 %v144, %v143
    %v155 = vpack.c.b16 %v146, %v145
    %v156 = vpack.c.b16 %v148, %v147
    %165 = vmatpush.bf16.msra.mxu0 %v156
    %166 = vmatpush.bf16.msra.mxu0 %v155
    %167 = vmatpush.bf16.msra.mxu0 %v154
    %168 = vmatpush.bf16.msra.mxu0 %v153
    %169 = vmatpush.bf16.msra.mxu0 %v152
    %170 = vmatpush.bf16.msra.mxu0 %v151
    %171 = vmatpush.bf16.msra.mxu0 %v150
    %172 = vmatpush.bf16.msra.mxu0 %v149
    %173 = vmatmul.bf16.gmra.mxu0 %v100
    %v174 = vpop.f32.mrf.mxu0
    %v175 = vadd.f32 0.0, %v174
    %v176 = vpop.f32.mrf.mxu0
    %v177 = vadd.f32 0.0, %v176
    %178 = vdwg.mxu0
    %v179 = vadd.f32 %v96, %v175
    %v180 = vadd.f32 %v97, %v177
    %181 = vst [vmem:[#allocation2] sm:$0xff] %v179
    %182 = vst [vmem:[#allocation2 + $0x8] sm:$0xff] %v180
    // Predicated region
    $region50: #{tpu_custom_call.1} parent=1 // pred_check
      %p183 = pneg %p90
    $region51: #{tpu_custom_call.1} parent=1 // pred_check_branch
      %185 = sbr.rel (%p183) target = $region53
    $region52: #{tpu_custom_call.1} parent=1 // pred_region
      %v186 = vld [vmem:[#allocation2] sm:$0xff]
      %v187 = vld [vmem:[#allocation2 + $0x8] sm:$0xff]
      %v188 = vld [vmem:[%s2] sm:$0x1]
      %v190 = vperm.slane %v188, 0
      %v192 = vadd.f32 %v186, %v190
      %v193 = vadd.f32 %v187, %v190
      %v194 = vmax.f32 %v192, 0.0
      %v195 = vmax.f32 %v193, 0.0
      %v196 = vpack.c.bf16 %v195, %v194
      %v197 = vld [vmem:[#allocation8] sm:$0xf]
      %v198 = vld [vmem:[#allocation8 + $0x4] sm:$0xf]
      %v199 = vld [vmem:[#allocation8 + $0x8] sm:$0xf]
      %v200 = vld [vmem:[#allocation8 + $0xc] sm:$0xf]
      %v201 = vld [vmem:[#allocation8 + $0x10] sm:$0xf]
      %v202 = vld [vmem:[#allocation8 + $0x14] sm:$0xf]
      %v203 = vld [vmem:[#allocation8 + $0x18] sm:$0xf]
      %v204 = vld [vmem:[#allocation8 + $0x1c] sm:$0xf]
      %v205 = vld [vmem:[#allocation8 + $0x20] sm:$0xf]
      %v206 = vld [vmem:[#allocation8 + $0x24] sm:$0xf]
      %v207 = vld [vmem:[#allocation8 + $0x28] sm:$0xf]
      %v208 = vld [vmem:[#allocation8 + $0x2c] sm:$0xf]
      %v209 = vld [vmem:[#allocation8 + $0x30] sm:$0xf]
      %v210 = vld [vmem:[#allocation8 + $0x34] sm:$0xf]
      %v211 = vld [vmem:[#allocation8 + $0x38] sm:$0xf]
      %v212 = vld [vmem:[#allocation8 + $0x3c] sm:$0xf]
      %v213 = vld [vmem:[%s4] sm:$0x1]
      %v215 = vperm.slane %v213, 0
      %v233 = vunpack.c.l.b16 %v197
      %v234 = vunpack.c.l.b16 %v198
      %v235 = vunpack.c.l.b16 %v199
      %v236 = vunpack.c.l.b16 %v200
      %v237 = vunpack.c.l.b16 %v201
      %v238 = vunpack.c.l.b16 %v202
      %v239 = vunpack.c.l.b16 %v203
      %v240 = vunpack.c.l.b16 %v204
      %v241 = vunpack.c.l.b16 %v205
      %v242 = vunpack.c.l.b16 %v206
      %v243 = vunpack.c.l.b16 %v207
      %v244 = vunpack.c.l.b16 %v208
      %v245 = vunpack.c.l.b16 %v209
      %v246 = vunpack.c.l.b16 %v210
      %v247 = vunpack.c.l.b16 %v211
      %v248 = vunpack.c.l.b16 %v212
      %v249 = vpack.c.b16 %v234, %v233
      %v250 = vpack.c.b16 %v236, %v235
      %v251 = vpack.c.b16 %v238, %v237
      %v252 = vpack.c.b16 %v240, %v239
      %v253 = vpack.c.b16 %v242, %v241
      %v254 = vpack.c.b16 %v244, %v243
      %v255 = vpack.c.b16 %v246, %v245
      %v256 = vpack.c.b16 %v248, %v247
      %265 = vmatpush.bf16.msra.mxu0 %v256
      %266 = vmatpush.bf16.msra.mxu0 %v255
      %267 = vmatpush.bf16.msra.mxu0 %v254
      %268 = vmatpush.bf16.msra.mxu0 %v253
      %269 = vmatpush.bf16.msra.mxu0 %v252
      %270 = vmatpush.bf16.msra.mxu0 %v251
      %271 = vmatpush.bf16.msra.mxu0 %v250
      %272 = vmatpush.bf16.msra.mxu0 %v249
      %273 = vmatmul.bf16.gmra.mxu0 %v196
      %v274 = vpop.f32.mrf.mxu0
      %v275 = vadd.f32 %v215, %v274
      %v276 = vpop.f32.mrf.mxu0
      %v277 = vadd.f32 %v215, %v276
      %278 = vdwg.mxu0
      %v279 = vmax.f32 %v275, 0.0
      %v280 = vmax.f32 %v277, 0.0
      %v281 = vpack.c.bf16 %v280, %v279
      %v282 = vld [vmem:[#allocation9] sm:$0xf]
      %v283 = vld [vmem:[#allocation9 + $0x4] sm:$0xf]
      %v284 = vld [vmem:[#allocation9 + $0x8] sm:$0xf]
      %v285 = vld [vmem:[#allocation9 + $0xc] sm:$0xf]
      %v286 = vld [vmem:[#allocation9 + $0x10] sm:$0xf]
      %v287 = vld [vmem:[#allocation9 + $0x14] sm:$0xf]
      %v288 = vld [vmem:[#allocation9 + $0x18] sm:$0xf]
      %v289 = vld [vmem:[#allocation9 + $0x1c] sm:$0xf]
      %v290 = vld [vmem:[#allocation9 + $0x20] sm:$0xf]
      %v291 = vld [vmem:[#allocation9 + $0x24] sm:$0xf]
      %v292 = vld [vmem:[#allocation9 + $0x28] sm:$0xf]
      %v293 = vld [vmem:[#allocation9 + $0x2c] sm:$0xf]
      %v294 = vld [vmem:[#allocation9 + $0x30] sm:$0xf]
      %v295 = vld [vmem:[#allocation9 + $0x34] sm:$0xf]
      %v296 = vld [vmem:[#allocation9 + $0x38] sm:$0xf]
      %v297 = vld [vmem:[#allocation9 + $0x3c] sm:$0xf]
      %v298 = vld [vmem:[%s6] sm:$0x1]
      %v300 = vperm.slane %v298, 0
      %v318 = vunpack.c.l.b16 %v282
      %v319 = vunpack.c.l.b16 %v283
      %v320 = vunpack.c.l.b16 %v284
      %v321 = vunpack.c.l.b16 %v285
      %v322 = vunpack.c.l.b16 %v286
      %v323 = vunpack.c.l.b16 %v287
      %v324 = vunpack.c.l.b16 %v288
      %v325 = vunpack.c.l.b16 %v289
      %v326 = vunpack.c.l.b16 %v290
      %v327 = vunpack.c.l.b16 %v291
      %v328 = vunpack.c.l.b16 %v292
      %v329 = vunpack.c.l.b16 %v293
      %v330 = vunpack.c.l.b16 %v294
      %v331 = vunpack.c.l.b16 %v295
      %v332 = vunpack.c.l.b16 %v296
      %v333 = vunpack.c.l.b16 %v297
      %v334 = vpack.c.b16 %v319, %v318
      %v335 = vpack.c.b16 %v321, %v320
      %v336 = vpack.c.b16 %v323, %v322
      %v337 = vpack.c.b16 %v325, %v324
      %v338 = vpack.c.b16 %v327, %v326
      %v339 = vpack.c.b16 %v329, %v328
      %v340 = vpack.c.b16 %v331, %v330
      %v341 = vpack.c.b16 %v333, %v332
      %350 = vmatpush.bf16.msra.mxu0 %v341
      %351 = vmatpush.bf16.msra.mxu0 %v340
      %352 = vmatpush.bf16.msra.mxu0 %v339
      %353 = vmatpush.bf16.msra.mxu0 %v338
      %354 = vmatpush.bf16.msra.mxu0 %v337
      %355 = vmatpush.bf16.msra.mxu0 %v336
      %356 = vmatpush.bf16.msra.mxu0 %v335
      %357 = vmatpush.bf16.msra.mxu0 %v334
      %358 = vmatmul.bf16.gmra.mxu0 %v281
      %v359 = vpop.f32.mrf.mxu0
      %v360 = vadd.f32 %v300, %v359
      %v361 = vpop.f32.mrf.mxu0
      %v362 = vadd.f32 %v300, %v361
      %363 = vdwg.mxu0
      %364 = vst [vmem:[#allocation11] sm:$0xff] %v360
      %365 = vst [vmem:[#allocation11 + $0x8] sm:$0xff] %v362
    $region53: #{tpu_custom_call.1} parent=1 // pred_fallthru
      _
    // Predicated region
    $region54: #{tpu_custom_call.1} parent=1 // pred_check
      _
    $region55: #{tpu_custom_call.1} parent=1 // pred_check_branch
      %367 = sbr.rel (0) target = $region57
    $region56: #{tpu_custom_call.1} parent=1 // pred_region
      %369 = vsyncadd [#allocation5], 0
      %s370 = sshll.u32 [#allocation11], 4
      %s371 = int_to_ptr.vmem [resolvable:$true] %s370
      %s372 = sshll.u32 %s7, 4
      %s373 = int_to_ptr.hbm [resolvable:$true] %s372
      %378 = dma.vmem_to_hbm [thread:$0]  %s371, 256, %s373, [#allocation5], 128, 128, 8
    $region57: #{tpu_custom_call.1} parent=1 // pred_fallthru
      _
    // Predicated region
    $region58: #{tpu_custom_call.1} parent=1 // pred_check
      _
    $region59: #{tpu_custom_call.1} parent=1 // pred_check_branch
      %380 = sbr.rel (0) target = $region61
    $region60: #{tpu_custom_call.1} parent=1 // pred_region
      %382 = dma.done [#allocation5], 256
    $region61: #{tpu_custom_call.1} parent=1 // pred_fallthru
      _
    %383 = vsyncpa [#allocation4], 1
    %384 = vsyncpa [#allocation7], 1
    %385 = vsyncpa [#allocation10], 1
    %386 = vsyncpa [#allocation5], 1

</llo_original>
